<compile_context>
chip_gen: v7x
topology: tpu7x:2x2x1
jax: 0.10.0
libtpu: 0.0.40
codegen_flags: <defaults>
</compile_context>

<pallas_src>
import functools

import numpy as np
import jax
import jax.numpy as jnp
from jax import lax
from jax.experimental import pallas as pl
from jax.experimental.pallas import tpu as pltpu


# Conservative scoped-VMEM budget: above the 32 MiB default, below v7x's 64 MiB
# physical per-TC VMEM (leaves headroom for double-buffering).
_VMEM_LIMIT_BYTES = 48 * 1024 * 1024


def _pick_tile(dim, cap, align):
    """Largest tile <= cap that divides dim and is a multiple of `align`.

    Small dims (<= cap) use the full extent (allowed by the (8,128) rule).
    Falls back to the full extent if no aligned divisor exists.
    """
    if dim <= cap:
        return dim
    t = (cap // align) * align
    while t >= align:
        if dim % t == 0:
            return t
        t -= align
    return dim


# ----------------------------- Pallas kernels ------------------------------ #

def _matmul_kernel(x_ref, w_ref, o_ref, acc_ref):
    @pl.when(pl.program_id(2) == 0)
    def _init():
        acc_ref[...] = jnp.zeros_like(acc_ref)

    acc_ref[...] += jnp.dot(
        x_ref[...], w_ref[...], preferred_element_type=jnp.float32
    )

    @pl.when(pl.program_id(2) == pl.num_programs(2) - 1)
    def _finalize():
        o_ref[...] = acc_ref[...].astype(o_ref.dtype)


def _matmul_bias_kernel(x_ref, w_ref, b_ref, o_ref, acc_ref):
    @pl.when(pl.program_id(2) == 0)
    def _init():
        acc_ref[...] = jnp.zeros_like(acc_ref)

    acc_ref[...] += jnp.dot(
        x_ref[...], w_ref[...], preferred_element_type=jnp.float32
    )

    @pl.when(pl.program_id(2) == pl.num_programs(2) - 1)
    def _finalize():
        o_ref[...] = (acc_ref[...] + b_ref[...].astype(jnp.float32)).astype(o_ref.dtype)


def _attn_kernel(qkv_ref, bias_ref, o_ref, *, num_heads, head_dim, scale,
                 approx_recip):
    """One batch element per grid step; all heads computed in the body.

    qkv_ref : (N, 3C)  packed as [q heads | k heads | v heads] along the last axis
    bias_ref: (H, N, N) f32 relative-position bias (same tile every step -> DMA'd once)
    o_ref   : (N, C)   heads concatenated -> single lane-dense store
    """
    C = num_heads * head_dim
    qkv = qkv_ref[...]                                    # (N, 3C), single load
    scale_c = jnp.asarray(scale, dtype=qkv.dtype)

    # TODO(synk): for large N (e.g. >=1024) convert to a flash-style KV-tiled
    # online-softmax loop instead of materializing the full (N, N) scores.
    outs = []
    for h in range(num_heads):
        q = qkv[:, h * head_dim:(h + 1) * head_dim] * scale_c        # fold scale into q
        k = qkv[:, C + h * head_dim:C + (h + 1) * head_dim]
        v = qkv[:, 2 * C + h * head_dim:2 * C + (h + 1) * head_dim]

        # Contract the last axes directly (no explicit k.T / XLU transpose).
        s = lax.dot_general(q, k, (((1,), (1,)), ((), ())),
                            preferred_element_type=jnp.float32)
        s = s + bias_ref[h].astype(jnp.float32)

        # Softmax in f32 (safe on v5e which lacks bf16 VPU/EUP).
        m = jnp.max(s, axis=-1, keepdims=True)
        p = jnp.exp(s - m)
        l = jnp.sum(p, axis=-1, keepdims=True)
        p = p * pl.reciprocal(l, approx=approx_recip)

        outs.append(jnp.dot(p.astype(v.dtype), v,
                            preferred_element_type=jnp.float32))

    # Single lane-dense (N, C) store instead of H narrow (N, D) stores.
    o_ref[...] = jnp.concatenate(outs, axis=-1).astype(o_ref.dtype)


# ------------------------------ Pallas wrappers ----------------------------- #

def _pallas_linear(x2d, w, bias=None, *, tm_cap=512, tn_cap=512, tk_cap=512):
    """Tiled (M, K) @ (K, Np) [+ bias] -> (M, Np) with f32 accumulation."""
    M, K = x2d.shape
    Kw, Np = w.shape
    assert K == Kw

    tm = _pick_tile(M, tm_cap, 8)      # sublane-aligned
    tk = _pick_tile(K, tk_cap, 128)    # lane-aligned (reduction axis, last in grid)
    tn = _pick_tile(Np, tn_cap, 128)   # lane-aligned

    grid = (M // tm, Np // tn, K // tk)
    x_spec = pl.BlockSpec((tm, tk), lambda i, j, kk: (i, kk))
    w_spec = pl.BlockSpec((tk, tn), lambda i, j, kk: (kk, j))
    o_spec = pl.BlockSpec((tm, tn), lambda i, j, kk: (i, j))
    cparams = pltpu.CompilerParams(
        dimension_semantics=("parallel", "parallel", "arbitrary"),
        vmem_limit_bytes=_VMEM_LIMIT_BYTES,
    )
    scratch = [pltpu.VMEM((tm, tn), jnp.float32)]

    if bias is None:
        return pl.pallas_call(
            _matmul_kernel,
            out_shape=jax.ShapeDtypeStruct((M, Np), x2d.dtype),
            grid=grid,
            in_specs=[x_spec, w_spec],
            out_specs=o_spec,
            scratch_shapes=scratch,
            compiler_params=cparams,
        )(x2d, w)

    b_spec = pl.BlockSpec((1, tn), lambda i, j, kk: (0, j))
    return pl.pallas_call(
        _matmul_bias_kernel,
        out_shape=jax.ShapeDtypeStruct((M, Np), x2d.dtype),
        grid=grid,
        in_specs=[x_spec, w_spec, b_spec],
        out_specs=o_spec,
        scratch_shapes=scratch,
        compiler_params=cparams,
    )(x2d, w, bias)


def _pallas_attention(qkv, rel_bias, *, num_heads, head_dim, scale, approx_recip):
    """qkv: (B, N, 3C) packed projections; rel_bias: (H, N, N) f32 -> (B, N, C)."""
    B, N, C3 = qkv.shape
    C = num_heads * head_dim
    H = num_heads
    kernel = functools.partial(
        _attn_kernel, num_heads=num_heads, head_dim=head_dim, scale=scale,
        approx_recip=approx_recip)
    return pl.pallas_call(
        kernel,
        out_shape=jax.ShapeDtypeStruct((B, N, C), qkv.dtype),
        grid=(B,),
        in_specs=[
            pl.BlockSpec((None, N, C3), lambda b: (b, 0, 0)),
            # Constant block index -> the bias tile is not re-DMA'd every step.
            pl.BlockSpec((H, N, N), lambda b: (0, 0, 0)),
        ],
        out_specs=pl.BlockSpec((None, N, C), lambda b: (b, 0, 0)),
        compiler_params=pltpu.CompilerParams(
            dimension_semantics=("parallel",),
            vmem_limit_bytes=_VMEM_LIMIT_BYTES,
        ),
    )(qkv, rel_bias)


# ------------------------------ Module forward ------------------------------ #

def build_relative_index(max_dist):
    """Mirrors RelativeAttention._build_relative_index (pure JAX, precompute)."""
    coords = jnp.stack(
        jnp.meshgrid(jnp.arange(max_dist), jnp.arange(max_dist), indexing="ij"),
        axis=0,
    )                                                          # (2, M, M)
    coords_flat = coords.reshape(2, -1)                        # (2, M*M)
    rel = coords_flat[:, :, None] - coords_flat[:, None, :]    # (2, M^2, M^2)
    rel = jnp.transpose(rel, (1, 2, 0)) + (max_dist - 1)       # (M^2, M^2, 2)
    return rel[:, :, 0] * (2 * max_dist - 1) + rel[:, :, 1]    # (M^2, M^2)


def prepare_params(raw):
    """One-time parameter prep: pre-transpose weights (no per-forward .T)."""
    return {
        "w_qkv_t": jnp.asarray(raw["w_qkv"]).T,                        # (C, 3C)
        "w_proj_t": jnp.asarray(raw["w_proj"]).T,                      # (C, C)
        "b_proj": jnp.asarray(raw["b_proj"], jnp.float32).reshape(1, -1),
        "rel_bias_table": jnp.asarray(raw["rel_bias_table"], jnp.float32),
        "rel_index": raw["rel_index"],
    }


def relative_attention_forward(x, params, num_heads, *, compute_dtype=None):
    B, N, C = x.shape
    H = num_heads
    D = C // H
    scale = D ** (-0.5)

    dt = jnp.dtype(compute_dtype) if compute_dtype is not None else x.dtype
    is_bf16 = dt == jnp.dtype(jnp.bfloat16)

    x = x.astype(dt)
    w_qkv_t = params["w_qkv_t"].astype(dt)      # (C, 3C), pre-transposed
    w_proj_t = params["w_proj_t"].astype(dt)    # (C, C), pre-transposed
    b_proj = params["b_proj"]                   # (1, C), f32 (added in f32 in-kernel)

    # --- qkv projection (tiled Pallas matmul) ---
    qkv = _pallas_linear(x.reshape(B * N, C), w_qkv_t)       # (B*N, 3C)
    qkv = qkv.reshape(B, N, 3 * C)                           # free reshape, no permute

    # --- relative position bias ---
    # TODO(synk): table gather (data-dependent) left in plain JAX.
    idx = params["rel_index"][:N, :N].reshape(-1)
    rel_bias = params["rel_bias_table"][idx].reshape(N, N, H)
    rel_bias = jnp.transpose(rel_bias, (2, 0, 1)).astype(jnp.float32)   # (H, N, N)

    # --- attention core (one grid step per batch; all heads inside the body) ---
    out = _pallas_attention(qkv, rel_bias, num_heads=H, head_dim=D, scale=scale,
                            approx_recip=is_bf16)            # (B, N, C)

    # --- output projection (tiled Pallas matmul + bias) ---
    y = _pallas_linear(out.reshape(B * N, C), w_proj_t, bias=b_proj)
    return y.reshape(B, N, C)


# ------------------------------ Pure-JAX reference -------------------------- #

def reference_forward(x, raw, num_heads):
    B, N, C = x.shape
    H = num_heads
    D = C // H
    scale = D ** (-0.5)
    qkv = x @ raw["w_qkv"].T
    qkv = qkv.reshape(B, N, 3, H, D)
    q, k, v = jnp.transpose(qkv, (2, 0, 3, 1, 4))
    attn = jnp.einsum("bhnd,bhmd->bhnm", q, k) * scale
    idx = raw["rel_index"][:N, :N].reshape(-1)
    rel_bias = raw["rel_bias_table"][idx].reshape(N, N, H)
    rel_bias = jnp.transpose(rel_bias, (2, 0, 1))
    attn = attn + rel_bias[None]
    attn = jax.nn.softmax(attn, axis=-1)
    out = jnp.einsum("bhnm,bhmd->bhnd", attn, v)
    out = jnp.transpose(out, (0, 2, 1, 3)).reshape(B, N, C)
    return out @ raw["w_proj"].T + raw["b_proj"]


# ----------------------------------- Main ----------------------------------- #

if __name__ == "__main__":
    B, N, C, H = 2, 8, 32, 4        # batch, tokens, dim, heads  (head_dim = 8)
    max_rel_distance = 8            # small synthetic setting (default 128 in torch)

    key = jax.random.PRNGKey(0)
    k1, k2, k3, k4, k5 = jax.random.split(key, 5)
    x = jax.random.normal(k1, (B, N, C), jnp.float32)

    raw_params = {
        "w_qkv": 0.1 * jax.random.normal(k2, (3 * C, C), jnp.float32),
        "w_proj": 0.1 * jax.random.normal(k3, (C, C), jnp.float32),
        "b_proj": 0.1 * jax.random.normal(k4, (C,), jnp.float32),
        # Torch inits the bias table to zeros; use small nonzero values so the
        # relative-bias path is actually exercised.
        "rel_bias_table": 0.1
        * jax.random.normal(k5, ((2 * max_rel_distance - 1) ** 2, H), jnp.float32),
        "rel_index": build_relative_index(max_rel_distance),
    }
    params = prepare_params(raw_params)

    # f32 path: tight correctness check against the pure-JAX reference.
    y = relative_attention_forward(x, params, H)
    y = jax.block_until_ready(y)
    y_ref = reference_forward(x, raw_params, H)
    np.testing.assert_allclose(np.asarray(y), np.asarray(y_ref), rtol=1e-4, atol=1e-4)

    # bf16 MXU path (recommended for v6e/v7x): f32 accumulation + f32 softmax,
    # loose sanity tolerance because operands are cast to bf16.
    y_bf16 = relative_attention_forward(x, params, H, compute_dtype=jnp.bfloat16)
    y_bf16 = jax.block_until_ready(y_bf16)
    np.testing.assert_allclose(
        np.asarray(y_bf16, np.float32), np.asarray(y_ref), rtol=5e-2, atol=5e-2
    )

    print("KERNEL_OK")
</pallas_src>

<mosaic_0001>
module attributes {stable_mosaic.version = 11 : i64} {
  func.func @_matmul_kernel(%arg0: i32, %arg1: i32, %arg2: i32, %arg3: memref<16x32xf32, #tpu.memory_space<vmem>>, %arg4: memref<32x96xf32, #tpu.memory_space<vmem>>, %arg5: memref<16x96xf32, #tpu.memory_space<vmem>>, %arg6: memref<16x96xf32, #tpu.memory_space<vmem>>) attributes {dimension_semantics = [#tpu.dimension_semantics<parallel>, #tpu.dimension_semantics<parallel>, #tpu.dimension_semantics<arbitrary>], iteration_bounds = array<i64: 1, 1, 1>, scalar_prefetch = 0 : i64, scratch_operands = 1 : i64, tpu.core_type = #tpu.core_type<tc>, window_params = [{transform_indices = @transform_0, window_bounds = array<i64: 16, 32>}, {transform_indices = @transform_1, window_bounds = array<i64: 32, 96>}, {transform_indices = @transform_2, window_bounds = array<i64: 16, 96>}]} {
    %c0_i32 = arith.constant 0 : i32
    %0 = arith.cmpi eq, %arg2, %c0_i32 : i32
    %1 = arith.extui %0 : i1 to i32
    %c0_i32_0 = arith.constant 0 : i32
    %2 = arith.cmpi ne, %1, %c0_i32_0 : i32
    scf.if %2 {
      %cst_10 = arith.constant 0.000000e+00 : f32
      %12 = vector.broadcast %cst_10 : f32 to vector<16x96xf32>
      %c0_11 = arith.constant 0 : index
      %c0_12 = arith.constant 0 : index
      %13 = vector.load %arg6[%c0_11, %c0_12] : memref<16x96xf32, #tpu.memory_space<vmem>>, vector<16x96xf32>
      tpu.vector_store %arg6[%c0_11, %c0_12], %12 {strides = array<i32>} : memref<16x96xf32, #tpu.memory_space<vmem>>, vector<16x96xf32>,
    } else {
    }
    %c0 = arith.constant 0 : index
    %c0_1 = arith.constant 0 : index
    %3 = vector.load %arg6[%c0, %c0_1] : memref<16x96xf32, #tpu.memory_space<vmem>>, vector<16x96xf32>
    %c0_2 = arith.constant 0 : index
    %c0_3 = arith.constant 0 : index
    %4 = vector.load %arg3[%c0_2, %c0_3] : memref<16x32xf32, #tpu.memory_space<vmem>>, vector<16x32xf32>
    %c0_4 = arith.constant 0 : index
    %c0_5 = arith.constant 0 : index
    %5 = vector.load %arg4[%c0_4, %c0_5] : memref<32x96xf32, #tpu.memory_space<vmem>>, vector<32x96xf32>
    %cst = arith.constant dense<0.000000e+00> : vector<16x96xf32>
    %6 = tpu.matmul %4, %5, %cst {dimension_numbers = #tpu.dot_dimension_numbers<[1], [0], [0], [1], [0, 0, 1, 1], [], []>} : vector<16x32xf32>, vector<32x96xf32>, vector<16x96xf32> -> vector<16x96xf32>
    %7 = arith.addf %3, %6 : vector<16x96xf32>
    %c0_6 = arith.constant 0 : index
    %c0_7 = arith.constant 0 : index
    %8 = vector.load %arg6[%c0_6, %c0_7] : memref<16x96xf32, #tpu.memory_space<vmem>>, vector<16x96xf32>
    tpu.vector_store %arg6[%c0_6, %c0_7], %7 {strides = array<i32>} : memref<16x96xf32, #tpu.memory_space<vmem>>, vector<16x96xf32>,
    %c0_i32_8 = arith.constant 0 : i32
    %9 = arith.cmpi eq, %arg2, %c0_i32_8 : i32
    %10 = arith.extui %9 : i1 to i32
    %c0_i32_9 = arith.constant 0 : i32
    %11 = arith.cmpi ne, %10, %c0_i32_9 : i32
    scf.if %11 {
      %c0_10 = arith.constant 0 : index
      %c0_11 = arith.constant 0 : index
      %12 = vector.load %arg6[%c0_10, %c0_11] : memref<16x96xf32, #tpu.memory_space<vmem>>, vector<16x96xf32>
      %c0_12 = arith.constant 0 : index
      %c0_13 = arith.constant 0 : index
      %13 = vector.load %arg5[%c0_12, %c0_13] : memref<16x96xf32, #tpu.memory_space<vmem>>, vector<16x96xf32>
      tpu.vector_store %arg5[%c0_12, %c0_13], %12 {strides = array<i32>} : memref<16x96xf32, #tpu.memory_space<vmem>>, vector<16x96xf32>,
    } else {
    }
    return
  }
  func.func @transform_0(%arg0: i32, %arg1: i32, %arg2: i32) -> (i32, i32) {
    %c0_i32 = arith.constant 0 : i32
    return %arg0, %arg2 : i32, i32
  }
  func.func @transform_1(%arg0: i32, %arg1: i32, %arg2: i32) -> (i32, i32) {
    %c0_i32 = arith.constant 0 : i32
    return %arg2, %arg1 : i32, i32
  }
  func.func @transform_2(%arg0: i32, %arg1: i32, %arg2: i32) -> (i32, i32) {
    %c0_i32 = arith.constant 0 : i32
    return %arg0, %arg1 : i32, i32
  }
}

</mosaic_0001>

<llo_original>
// kernel: tpu_custom_call.1
$region0: #{tpu_custom_call.1}
  #allocation0 [shape = 'u32[]', space=smem, size = 0x4, offset = 0x4, fixed_abs, tag = 'smem constant byte address 0x4 - core index']
  #allocation1 [shape = 'u32[144,128]{1,0:T(1,128)}', space=vmem, size = 0x12000, scoped, tag = 'internal scratch']
  #allocation2 [shape = 'f32[16,96]{1,0:T(8,128)}', space=vmem, size = 0x2000, scoped, tag = 'scratch operand']
  %s0 = inlined_call_operand.hbm [shape: f32[16,32], index: 0, kind: input, shape index: {}]
  %s1 = inlined_call_operand.hbm [shape: f32[32,96], index: 1, kind: input, shape index: {}]
  %s2 = inlined_call_operand.hbm [shape: f32[16,96], index: 2, kind: output, shape index: {}]
  %s3 = sld [smem:[#allocation0]]
  $region34: #{tpu_custom_call.1} parent=0
    _
  %s5 = ssub.s32 1, %s3
  %s6 = scalar_select 0, %s5, %s3
  $region1: #{tpu_custom_call.1} parent=0
    #allocation3 [shape = 'u8[8192]{0}', space=vmem, size = 0x2000, scoped, tag = 'input window, operand 0, single buffered']
    #allocation4 [shape = 's32[1]{0}', space=sflag, size = 0x4, scoped, tag = 'scoped memory for tpu_custom_call.1']
    #allocation5 [shape = 's32[1]{0}', space=sflag, size = 0x4, scoped, tag = 'scoped memory for tpu_custom_call.1']
    #allocation6 [shape = 'u8[16384]{0}', space=vmem, size = 0x4000, scoped, tag = 'input window, operand 1, single buffered']
    #allocation7 [shape = 's32[1]{0}', space=sflag, size = 0x4, scoped, tag = 'scoped memory for tpu_custom_call.1']
    #allocation8 [shape = 'u8[8192]{0}', space=vmem, size = 0x2000, scoped, tag = 'output window, operand 0, single buffered']
    %7 = vsyncpa [#allocation4], 0
    %8 = vsyncpa [#allocation7], 0
    %9 = vsyncpa [#allocation5], 0
    // Predicated region
    $region2: #{tpu_custom_call.1} parent=1 // pred_check
      _
    $region3: #{tpu_custom_call.1} parent=1 // pred_check_branch
      %11 = sbr.rel (0) target = $region5
    $region4: #{tpu_custom_call.1} parent=1 // pred_region
      %s13 = ssub.s32 256, 256
      %14 = vsyncadd [#allocation4], %s13
      %s15 = sshll.u32 [#allocation3], 4
      %s16 = int_to_ptr.vmem [resolvable:$true] %s15
      %21 = dma.hbm_to_vmem [thread:$0]  %s0, 256, %s16, [#allocation4], 128, 128, 8
    $region5: #{tpu_custom_call.1} parent=1 // pred_fallthru
      _
    // Predicated region
    $region6: #{tpu_custom_call.1} parent=1 // pred_check
      _
    $region7: #{tpu_custom_call.1} parent=1 // pred_check_branch
      %23 = sbr.rel (0) target = $region9
    $region8: #{tpu_custom_call.1} parent=1 // pred_region
      %s25 = ssub.s32 512, 512
      %26 = vsyncadd [#allocation7], %s25
      %s27 = sshll.u32 [#allocation6], 4
      %s28 = int_to_ptr.vmem [resolvable:$true] %s27
      %33 = dma.hbm_to_vmem [thread:$0]  %s1, 512, %s28, [#allocation7], 128, 128, 8
    $region9: #{tpu_custom_call.1} parent=1 // pred_fallthru
      _
    // Predicated region
    $region10: #{tpu_custom_call.1} parent=1 // pred_check
      _
    $region11: #{tpu_custom_call.1} parent=1 // pred_check_branch
      %35 = sbr.rel (0) target = $region13
    $region12: #{tpu_custom_call.1} parent=1 // pred_region
      %36 = dma.done [#allocation4], 256
    $region13: #{tpu_custom_call.1} parent=1 // pred_fallthru
      _
    // Predicated region
    $region14: #{tpu_custom_call.1} parent=1 // pred_check
      _
    $region15: #{tpu_custom_call.1} parent=1 // pred_check_branch
      %38 = sbr.rel (0) target = $region17
    $region16: #{tpu_custom_call.1} parent=1 // pred_region
      %39 = dma.done [#allocation7], 512
    $region17: #{tpu_custom_call.1} parent=1 // pred_fallthru
      _
    %p40 = scmp.eq.s32.totalorder 0, 0
    // Predicated region
    $region18: #{tpu_custom_call.1} parent=1 // pred_check
      %p41 = pneg %p40
    $region19: #{tpu_custom_call.1} parent=1 // pred_check_branch
      %43 = sbr.rel (%p41) target = $region21
    $region20: #{tpu_custom_call.1} parent=1 // pred_region
      %vm44 = vcmask 785408
      %45 = vst.msk [vmem:[#allocation2] sm:$0xff] %vm44, 0.0
      %46 = vst.msk [vmem:[#allocation2 + $0x8] sm:$0xff] %vm44, 0.0
    $region21: #{tpu_custom_call.1} parent=1 // pred_fallthru
      _
    %v47 = vld [vmem:[#allocation2] sm:$0xff]
    %v48 = vld [vmem:[#allocation2 + $0x8] sm:$0xff]
    %v49 = vld [vmem:[#allocation3] sm:$0xff]
    %v50 = vld [vmem:[#allocation3 + $0x8] sm:$0xff]
    %v51 = vld [vmem:[#allocation6] sm:$0xff]
    %v52 = vld [vmem:[#allocation6 + $0x8] sm:$0xff]
    %v53 = vld [vmem:[#allocation6 + $0x10] sm:$0xff]
    %v54 = vld [vmem:[#allocation6 + $0x18] sm:$0xff]
    %vm55 = vcmask 261120
    %v57 = vsel %vm55, %v49, 0
    %v60 = vsel %vm55, %v50, 0
    %62 = vmatprep.subr.mxu0 0.0
    %63 = vmatpush1.msra.mxu0 %v51
    %64 = vmatprep.subr.mxu0 0.0
    %65 = vmatpush1.msra.mxu0 %v52
    %66 = vmatprep.subr.mxu0 0.0
    %67 = vmatpush1.msra.mxu0 %v53
    %68 = vmatprep.subr.mxu0 0.0
    %69 = vmatpush1.msra.mxu0 %v54
    %70 = vmatprep.subr.mxu0 0.0
    %71 = vmatpush1.msra.mxu0 0.0
    %72 = vmatprep.subr.mxu0 0.0
    %73 = vmatpush1.msra.mxu0 0.0
    %74 = vmatprep.subr.mxu0 0.0
    %75 = vmatpush1.msra.mxu0 0.0
    %76 = vmatprep.subr.mxu0 0.0
    %77 = vmatpush1.msra.mxu0 0.0
    %78 = vmatprep.subr.mxu0 0.0
    %79 = vmatpush1.msra.mxu0 0.0
    %80 = vmatprep.subr.mxu0 0.0
    %81 = vmatpush1.msra.mxu0 0.0
    %82 = vmatprep.subr.mxu0 0.0
    %83 = vmatpush1.msra.mxu0 0.0
    %84 = vmatprep.subr.mxu0 0.0
    %85 = vmatpush1.msra.mxu0 0.0
    %86 = vmatprep.subr.mxu0 0.0
    %87 = vmatpush1.msra.mxu0 0.0
    %88 = vmatprep.subr.mxu0 0.0
    %89 = vmatpush1.msra.mxu0 0.0
    %90 = vmatprep.subr.mxu0 0.0
    %91 = vmatpush1.msra.mxu0 0.0
    %92 = vmatprep.subr.mxu0 0.0
    %93 = vmatpush1.msra.mxu0 0.0
    %94 = vmatprep.subr.mxu0 0.0
    %95 = vmatpush1.msra.mxu0 0.0
    %96 = vmatprep.subr.mxu0 0.0
    %97 = vmatpush1.msra.mxu0 0.0
    %98 = vmatprep.subr.mxu0 0.0
    %99 = vmatpush1.msra.mxu0 0.0
    %100 = vmatprep.subr.mxu0 0.0
    %101 = vmatpush1.msra.mxu0 0.0
    %102 = vmatprep.subr.mxu0 0.0
    %103 = vmatpush1.msra.mxu0 0.0
    %104 = vmatprep.subr.mxu0 0.0
    %105 = vmatpush1.msra.mxu0 0.0
    %106 = vmatprep.subr.mxu0 0.0
    %107 = vmatpush1.msra.mxu0 0.0
    %108 = vmatprep.subr.mxu0 0.0
    %109 = vmatpush1.msra.mxu0 0.0
    %110 = vmatprep.subr.mxu0 0.0
    %111 = vmatpush1.msra.mxu0 0.0
    %112 = vmatprep.subr.mxu0 0.0
    %113 = vmatpush1.msra.mxu0 0.0
    %114 = vmatprep.subr.mxu0 0.0
    %115 = vmatpush1.msra.mxu0 0.0
    %116 = vmatprep.subr.mxu0 0.0
    %117 = vmatpush1.msra.mxu0 0.0
    %118 = vmatprep.subr.mxu0 0.0
    %119 = vmatpush1.msra.mxu0 0.0
    %120 = vmatprep.subr.mxu0 0.0
    %121 = vmatpush1.msra.mxu0 0.0
    %122 = vmatprep.subr.mxu0 0.0
    %123 = vmatpush1.msra.mxu0 0.0
    %124 = vmatprep.subr.mxu0 0.0
    %125 = vmatpush1.msra.mxu0 0.0
    %126 = vmatprep.mubr.f32.mxu0 0.0
    %127 = vmatmul.mubr.f32.gmra.mrb[0].mxu0 %v57
    %v128 = vpop.f32.mrb[0].mxu0
    %v129 = vadd.f32 0.0, %v128
    %v130 = vpop.f32.mrb[0].mxu0
    %131 = vmatprep.mubr.f32.mxu0 0.0
    %132 = vmatmul.mubr.f32.gmra.mrb[0].mxu0 %v60
    %v133 = vpop.f32.mrb[0].mxu0
    %v134 = vadd.f32 0.0, %v133
    %v135 = vpop.f32.mrb[0].mxu0
    %136 = vdwg.mxu0
    %v137 = vadd.f32 %v47, %v129
    %v138 = vadd.f32 %v48, %v134
    %vm139 = vcmask 785408
    %140 = vst.msk [vmem:[#allocation2] sm:$0xff] %vm139, %v137
    %141 = vst.msk [vmem:[#allocation2 + $0x8] sm:$0xff] %vm139, %v138
    // Predicated region
    $region22: #{tpu_custom_call.1} parent=1 // pred_check
      %p142 = pneg %p40
    $region23: #{tpu_custom_call.1} parent=1 // pred_check_branch
      %144 = sbr.rel (%p142) target = $region25
    $region24: #{tpu_custom_call.1} parent=1 // pred_region
      %v145 = vld [vmem:[#allocation2] sm:$0xff]
      %v146 = vld [vmem:[#allocation2 + $0x8] sm:$0xff]
      %147 = vst.msk [vmem:[#allocation8] sm:$0xff] %vm139, %v145
      %148 = vst.msk [vmem:[#allocation8 + $0x8] sm:$0xff] %vm139, %v146
    $region25: #{tpu_custom_call.1} parent=1 // pred_fallthru
      _
    // Predicated region
    $region26: #{tpu_custom_call.1} parent=1 // pred_check
      _
    $region27: #{tpu_custom_call.1} parent=1 // pred_check_branch
      %150 = sbr.rel (0) target = $region29
    $region28: #{tpu_custom_call.1} parent=1 // pred_region
      %s152 = ssub.s32 256, 256
      %153 = vsyncadd [#allocation5], %s152
      %s154 = sshll.u32 [#allocation8], 4
      %s155 = int_to_ptr.vmem [resolvable:$true] %s154
      %160 = dma.vmem_to_hbm [thread:$0]  %s155, 256, %s2, [#allocation5], 128, 128, 8
    $region29: #{tpu_custom_call.1} parent=1 // pred_fallthru
      _
    // Predicated region
    $region30: #{tpu_custom_call.1} parent=1 // pred_check
      _
    $region31: #{tpu_custom_call.1} parent=1 // pred_check_branch
      %162 = sbr.rel (0) target = $region33
    $region32: #{tpu_custom_call.1} parent=1 // pred_region
      %163 = dma.done [#allocation5], 256
    $region33: #{tpu_custom_call.1} parent=1 // pred_fallthru
      _
    %164 = vsyncpa [#allocation4], 1
    %165 = vsyncpa [#allocation7], 1
    %166 = vsyncpa [#allocation5], 1

</llo_original>
